<compile_context>
chip_gen: v7x
topology: tpu7x:2x2x1
jax: 0.10.0
libtpu: 0.0.40
codegen_flags: <defaults>
</compile_context>

<pallas_src>
import jax
import jax.numpy as jnp
from jax import lax
from jax.experimental import pallas as pl
from jax.experimental.pallas import tpu as pltpu

# ---- problem sizes (small, consistent with the module) ----
N, CIN, H, W = 2, 4, 16, 16        # input (PyTorch NCHW = [2, 4, 16, 16])
COUT = 8                           # inner conv out channels
KH = KW = 3                        # inner conv kernel
STRIDE, PAD = 2, 1
OH, OW = H // STRIDE, W // STRIDE  # 8, 8 (inner-conv / final output spatial)

NPOS = N * OH * OW                 # 128 output positions -> lane axis of M^T and out
NTAP = KH * KW * CIN               # 36 im2col features  -> sublane (K) axis of M^T


def resnet_kernel(wf_ref, mt_ref, b_ref, out_ref):
    """wf : (COUT, NTAP) = (8, 36)   fused [conv3x3 + 0.25*pooled-bypass] weight (VMEM)
       mt : (NTAP, NPOS) = (36, 128) im2col matrix, K on sublanes, positions on lanes (VMEM)
       b  : (COUT, 1)                conv bias (VMEM)
       out: (COUT, NPOS) = (8, 128)  lane-dense output slab, one f32 vreg (VMEM)

    One canonical MXU matmul + one VPU lane-broadcast add + one unmasked vreg store."""
    acc = lax.dot_general(wf_ref[...], mt_ref[...],
                          (((1,), (0,)), ((), ())),          # contract K: lhs dim1, rhs dim0
                          preferred_element_type=jnp.float32)
    out_ref[...] = acc + b_ref[...]                           # (8,1) broadcasts along lanes


@jax.jit
def resnet_forward(x_nchw, w_hwio, b, wb):
    """x_nchw: (N, CIN, H, W) f32 -> (N, COUT, OH, OW) f32 (NCHW out)."""
    # Exact-divisor guard: the pooled-bypass weight fold (and the fixed 2x2 mean) are
    # only exact when the bypass spatial dims divide the output spatial dims.
    assert H % OH == 0 and W % OW == 0, "AdaptiveAvgPool2d fold requires divisibility"

    # ---- one-time weight fusion (tiny, constant-foldable when weights are constants) --
    # Row order ((kh*KW + kw)*CIN + c) matches the im2col row order built below.
    wf_rows = w_hwio.reshape(NTAP, COUT)                      # (36, 8)
    # Fold the 2x2-mean-pooled 1x1 bypass: pooling commutes with the linear projection,
    # and the four pooled samples are exactly the four interior conv taps.
    for kh in (1, 2):
        for kw in (1, 2):
            t = kh * KW + kw
            wf_rows = wf_rows.at[t * CIN:(t + 1) * CIN, :].add(0.25 * wb)
    wf = wf_rows.T                                            # (COUT, NTAP) = (8, 36)

    # ---- im2col in the jitted wrapper: channel-major, positions flattened onto lanes --
    # (Per review: a dense (K, 128) slab DMA'd once beats lane-sparse in-kernel slicing.)
    x_cm = jnp.transpose(x_nchw, (1, 0, 2, 3))                # (CIN, N, H, W)
    xp = jnp.pad(x_cm, ((0, 0), (0, 0), (PAD, PAD), (PAD, PAD)))   # (CIN, N, 18, 18)
    taps = [xp[:, :, kh:kh + STRIDE * OH:STRIDE, kw:kw + STRIDE * OW:STRIDE]
            for kh in range(KH) for kw in range(KW)]          # 9 x (CIN, N, OH, OW)
    mt = jnp.stack(taps, axis=0).reshape(NTAP, NPOS)          # (36, 128), lane-dense

    vmem = pl.BlockSpec(memory_space=pltpu.MemorySpace.VMEM)
    out_t = pl.pallas_call(
        resnet_kernel,
        out_shape=jax.ShapeDtypeStruct((COUT, NPOS), jnp.float32),   # (8, 128): one vreg
        in_specs=[vmem, vmem, vmem],
        out_specs=vmem,
    )(wf, mt, b.reshape(COUT, 1))

    # (COUT, N*OH*OW) -> NCHW  (4 KiB reshape+transpose in the wrapper).
    return jnp.transpose(out_t.reshape(COUT, N, OH, OW), (1, 0, 2, 3))


def _reference(x_nchw, w_hwio, b, wb):
    """Pure-JAX reference mirroring the PyTorch forward (for a silent check)."""
    x = jnp.transpose(x_nchw, (0, 2, 3, 1))
    conv = lax.conv_general_dilated(
        x, w_hwio, window_strides=(STRIDE, STRIDE),
        padding=((PAD, PAD), (PAD, PAD)),
        dimension_numbers=('NHWC', 'HWIO', 'NHWC')) + b.reshape(1, 1, 1, COUT)
    byp = lax.conv_general_dilated(
        x, wb.reshape(1, 1, CIN, COUT), window_strides=(1, 1), padding='VALID',
        dimension_numbers=('NHWC', 'HWIO', 'NHWC'))
    pooled = byp.reshape(N, OH, 2, OW, 2, COUT).mean(axis=(2, 4))
    return jnp.transpose(conv + pooled, (0, 3, 1, 2))


if __name__ == "__main__":
    key = jax.random.PRNGKey(0)
    kx, kw_, kb, kbp = jax.random.split(key, 4)

    # deterministic synthetic params (shapes from the module __init__)
    x = jax.random.normal(kx, (N, CIN, H, W), jnp.float32)              # input, NCHW
    w = 0.1 * jax.random.normal(kw_, (KH, KW, CIN, COUT), jnp.float32)  # conv3x3, HWIO
    b = 0.1 * jax.random.normal(kb, (COUT,), jnp.float32)               # conv3x3 bias
    wb = 0.1 * jax.random.normal(kbp, (CIN, COUT), jnp.float32)         # 1x1 bypass

    out = jax.block_until_ready(resnet_forward(x, w, b, wb))
    ref = jax.block_until_ready(_reference(x, w, b, wb))

    assert out.shape == (N, COUT, OH, OW)
    err = float(jnp.max(jnp.abs(out - ref)))
    assert jnp.allclose(out, ref, atol=1e-4, rtol=1e-4), err

    # TODO(synk): AdaptiveAvgPool2d with non-divisible H/OH (variable-size windows) is
    # not expressible as a fixed 2x2 mean / weight fold; this kernel covers the exact
    # divisor case only (guarded by the assert in resnet_forward).
    print("KERNEL_OK")
</pallas_src>

<mosaic_0001>
module attributes {stable_mosaic.version = 11 : i64} {
  func.func @resnet_kernel(%arg0: memref<8x36xf32, #tpu.memory_space<vmem>>, %arg1: memref<36x128xf32, #tpu.memory_space<vmem>>, %arg2: memref<8x1xf32, #tpu.memory_space<vmem>>, %arg3: memref<8x128xf32, #tpu.memory_space<vmem>>) attributes {dimension_semantics = [], scalar_prefetch = 0 : i64, scratch_operands = 0 : i64, tpu.core_type = #tpu.core_type<tc>} {
    %c0 = arith.constant 0 : index
    %c0_0 = arith.constant 0 : index
    %0 = vector.load %arg0[%c0, %c0_0] : memref<8x36xf32, #tpu.memory_space<vmem>>, vector<8x36xf32>
    %c0_1 = arith.constant 0 : index
    %c0_2 = arith.constant 0 : index
    %1 = vector.load %arg1[%c0_1, %c0_2] : memref<36x128xf32, #tpu.memory_space<vmem>>, vector<36x128xf32>
    %cst = arith.constant dense<0.000000e+00> : vector<8x128xf32>
    %2 = tpu.matmul %0, %1, %cst {dimension_numbers = #tpu.dot_dimension_numbers<[1], [0], [0], [1], [0, 0, 1, 1], [], []>} : vector<8x36xf32>, vector<36x128xf32>, vector<8x128xf32> -> vector<8x128xf32>
    %c0_3 = arith.constant 0 : index
    %c0_4 = arith.constant 0 : index
    %3 = vector.load %arg2[%c0_3, %c0_4] : memref<8x1xf32, #tpu.memory_space<vmem>>, vector<8x1xf32>
    %4 = vector.broadcast %3 : vector<8x1xf32> to vector<8x128xf32>
    %5 = arith.addf %2, %4 : vector<8x128xf32>
    %c0_5 = arith.constant 0 : index
    %c0_6 = arith.constant 0 : index
    %6 = vector.load %arg3[%c0_5, %c0_6] : memref<8x128xf32, #tpu.memory_space<vmem>>, vector<8x128xf32>
    tpu.vector_store %arg3[%c0_5, %c0_6], %5 {strides = array<i32>} : memref<8x128xf32, #tpu.memory_space<vmem>>, vector<8x128xf32>,
    return
  }
}

</mosaic_0001>

<llo_original>
// kernel: resnet_forward.1
$region0: #{resnet_forward.1}
  #allocation0 [shape = 'u32[]', space=smem, size = 0x4, offset = 0x4, fixed_abs, tag = 'smem constant byte address 0x4 - core index']
  #allocation1 [shape = 'u32[144,128]{1,0:T(1,128)}', space=vmem, size = 0x12000, scoped, tag = 'internal scratch']
  %s0 = inlined_call_operand.vmem [shape: f32[8,36], index: 0, kind: input, shape index: {}]
  %s1 = inlined_call_operand.vmem [shape: f32[36,128], index: 1, kind: input, shape index: {}]
  %s2 = inlined_call_operand.vmem [shape: f32[8,1], index: 2, kind: input, shape index: {}]
  %s3 = inlined_call_operand.vmem [shape: f32[8,128], index: 3, kind: output, shape index: {}]
  %s4 = sld [smem:[#allocation0]]
  $region22: #{resnet_forward.1} parent=0
    _
  %s6 = ssub.s32 1, %s4
  %s7 = scalar_select 0, %s6, %s4
  // Predicated region
  $region2: #{resnet_forward.1} parent=0 // pred_check
    _
  $region3: #{resnet_forward.1} parent=0 // pred_check_branch
    %9 = sbr.rel (0) target = $region5
  $region4: #{resnet_forward.1} parent=0 // pred_region
    _
  $region5: #{resnet_forward.1} parent=0 // pred_fallthru
    _
  // Predicated region
  $region6: #{resnet_forward.1} parent=0 // pred_check
    _
  $region7: #{resnet_forward.1} parent=0 // pred_check_branch
    %11 = sbr.rel (0) target = $region9
  $region8: #{resnet_forward.1} parent=0 // pred_region
    _
  $region9: #{resnet_forward.1} parent=0 // pred_fallthru
    _
  // Predicated region
  $region10: #{resnet_forward.1} parent=0 // pred_check
    _
  $region11: #{resnet_forward.1} parent=0 // pred_check_branch
    %13 = sbr.rel (0) target = $region13
  $region12: #{resnet_forward.1} parent=0 // pred_region
    _
  $region13: #{resnet_forward.1} parent=0 // pred_fallthru
    _
  %v14 = vld [vmem:[%s0] sm:$0xff]
  %v15 = vld [vmem:[%s1] sm:$0xff]
  %v16 = vld [vmem:[%s1 + $0x8] sm:$0xff]
  %v17 = vld [vmem:[%s1 + $0x10] sm:$0xff]
  %v18 = vld [vmem:[%s1 + $0x18] sm:$0xff]
  %v19 = vld [vmem:[%s1 + $0x20] sm:$0xf]
  %v20 = vld [vmem:[%s2] sm:$0xff]
  %22 = vset.pattern.permute.xlu0 0
  %23 = vperm.xlu0 %22, %v20
  %v24 = vpop.permute.xlu0 %23
  %vm26 = vcmask 293888
  %v28 = vsel %vm26, %v14, 0
  %vm30 = vcmask 1043456
  %v32 = vsel %vm30, %v19, 0
  %34 = vmatprep.subr.mxu0 0.0
  %35 = vmatpush1.msra.mxu0 %v15
  %36 = vmatprep.subr.mxu0 0.0
  %37 = vmatpush1.msra.mxu0 %v16
  %38 = vmatprep.subr.mxu0 0.0
  %39 = vmatpush1.msra.mxu0 %v17
  %40 = vmatprep.subr.mxu0 0.0
  %41 = vmatpush1.msra.mxu0 %v18
  %42 = vmatprep.subr.mxu0 0.0
  %43 = vmatpush1.msra.mxu0 %v32
  %44 = vmatprep.subr.mxu0 0.0
  %45 = vmatpush1.msra.mxu0 0.0
  %46 = vmatprep.subr.mxu0 0.0
  %47 = vmatpush1.msra.mxu0 0.0
  %48 = vmatprep.subr.mxu0 0.0
  %49 = vmatpush1.msra.mxu0 0.0
  %50 = vmatprep.subr.mxu0 0.0
  %51 = vmatpush1.msra.mxu0 0.0
  %52 = vmatprep.subr.mxu0 0.0
  %53 = vmatpush1.msra.mxu0 0.0
  %54 = vmatprep.subr.mxu0 0.0
  %55 = vmatpush1.msra.mxu0 0.0
  %56 = vmatprep.subr.mxu0 0.0
  %57 = vmatpush1.msra.mxu0 0.0
  %58 = vmatprep.subr.mxu0 0.0
  %59 = vmatpush1.msra.mxu0 0.0
  %60 = vmatprep.subr.mxu0 0.0
  %61 = vmatpush1.msra.mxu0 0.0
  %62 = vmatprep.subr.mxu0 0.0
  %63 = vmatpush1.msra.mxu0 0.0
  %64 = vmatprep.subr.mxu0 0.0
  %65 = vmatpush1.msra.mxu0 0.0
  %66 = vmatprep.subr.mxu0 0.0
  %67 = vmatpush1.msra.mxu0 0.0
  %68 = vmatprep.subr.mxu0 0.0
  %69 = vmatpush1.msra.mxu0 0.0
  %70 = vmatprep.subr.mxu0 0.0
  %71 = vmatpush1.msra.mxu0 0.0
  %72 = vmatprep.subr.mxu0 0.0
  %73 = vmatpush1.msra.mxu0 0.0
  %74 = vmatprep.subr.mxu0 0.0
  %75 = vmatpush1.msra.mxu0 0.0
  %76 = vmatprep.subr.mxu0 0.0
  %77 = vmatpush1.msra.mxu0 0.0
  %78 = vmatprep.subr.mxu0 0.0
  %79 = vmatpush1.msra.mxu0 0.0
  %80 = vmatprep.subr.mxu0 0.0
  %81 = vmatpush1.msra.mxu0 0.0
  %82 = vmatprep.subr.mxu0 0.0
  %83 = vmatpush1.msra.mxu0 0.0
  %84 = vmatprep.subr.mxu0 0.0
  %85 = vmatpush1.msra.mxu0 0.0
  %86 = vmatprep.subr.mxu0 0.0
  %87 = vmatpush1.msra.mxu0 0.0
  %88 = vmatprep.subr.mxu0 0.0
  %89 = vmatpush1.msra.mxu0 0.0
  %90 = vmatprep.subr.mxu0 0.0
  %91 = vmatpush1.msra.mxu0 0.0
  %92 = vmatprep.subr.mxu0 0.0
  %93 = vmatpush1.msra.mxu0 0.0
  %94 = vmatprep.subr.mxu0 0.0
  %95 = vmatpush1.msra.mxu0 0.0
  %96 = vmatprep.subr.mxu0 0.0
  %97 = vmatpush1.msra.mxu0 0.0
  %98 = vmatprep.mubr.f32.mxu0 0.0
  %99 = vmatmul.mubr.f32.gmra.mrb[0].mxu0 %v28
  %v100 = vpop.f32.mrb[0].mxu0
  %v101 = vadd.f32 %v24, %v100
  %v102 = vpop.f32.mrb[0].mxu0
  %103 = vdwg.mxu0
  %104 = vst [vmem:[%s3] sm:$0xff] %v101
  // Predicated region
  $region14: #{resnet_forward.1} parent=0 // pred_check
    _
  $region15: #{resnet_forward.1} parent=0 // pred_check_branch
    %106 = sbr.rel (0) target = $region17
  $region16: #{resnet_forward.1} parent=0 // pred_region
    _
  $region17: #{resnet_forward.1} parent=0 // pred_fallthru
    _
  // Predicated region
  $region18: #{resnet_forward.1} parent=0 // pred_check
    _
  $region19: #{resnet_forward.1} parent=0 // pred_check_branch
    %108 = sbr.rel (0) target = $region21
  $region20: #{resnet_forward.1} parent=0 // pred_region
    _
  $region21: #{resnet_forward.1} parent=0 // pred_fallthru
    _

</llo_original>
